<compile_context>
chip_gen: v7x
topology: tpu7x:2x2x1
jax: 0.10.0
libtpu: 0.0.40
codegen_flags: <defaults>
</compile_context>

<pallas_src>
import functools

import jax
import jax.numpy as jnp
from jax.experimental import pallas as pl
from jax.experimental.pallas import tpu as pltpu

LANE = 128  # TPU lane width


def _round_up(x, m):
    return ((x + m - 1) // m) * m


def _vmem_limit_bytes():
    """Per-chip scoped VMEM cap: ~3/4 of physical (128 MiB -> 96 MiB on v5e/v6e,
    64 MiB -> 48 MiB on v7x). Falls back to 64 MiB if the query is unavailable."""
    try:
        cap = getattr(pltpu.get_tpu_info(), "vmem_capacity_bytes", None)
        if cap:
            return int(cap) * 3 // 4
    except Exception:
        pass
    return 64 * 1024 * 1024


# ----------------------------- Pallas kernel --------------------------------
def _net_kernel(lhat_ref, x_ref, w1_ref, b1_ref, w2_ref, b2_ref, out_ref,
                *, K, f_pad, h_pad):
    """Fused forward:  log_softmax( Cheb2( relu( Cheb1(x) ) ) ).

    Cheb(x) = sum_k T_k(x) @ W_k + b with per-hop f32 accumulation.
    T_0 = x, T_1 = L_hat x, T_k = 2 L_hat T_{k-1} - T_{k-2}.
    Dropout is identity (inference / training=False).
    """
    lhat = lhat_ref[...]  # (N, N) bf16 scaled Laplacian (MXU operand)

    def cheb_layer(x_f32, w_ref, b_ref, f):
        # Chebyshev recurrence in f32; each T_k cast to bf16 exactly once and
        # reused for both the next propagation dot and the weight accumulation.
        t_pp = x_f32                                    # T_0 (f32, for recurrence)
        t_bf = x_f32.astype(jnp.bfloat16)               # T_0 (bf16, MXU operand)
        acc = jnp.dot(t_bf, w_ref[0:f, :],
                      preferred_element_type=jnp.float32) + b_ref[...]
        if K > 1:
            t_p = jnp.dot(lhat, t_bf, preferred_element_type=jnp.float32)   # T_1
            t_p_bf = t_p.astype(jnp.bfloat16)
            acc = acc + jnp.dot(t_p_bf, w_ref[f:2 * f, :],
                                preferred_element_type=jnp.float32)
            for k in range(2, K):
                t_k = 2.0 * jnp.dot(lhat, t_p_bf,
                                    preferred_element_type=jnp.float32) - t_pp
                t_k_bf = t_k.astype(jnp.bfloat16)
                acc = acc + jnp.dot(t_k_bf, w_ref[k * f:(k + 1) * f, :],
                                    preferred_element_type=jnp.float32)
                t_pp, t_p_bf = t_p, t_k_bf
                t_p = t_k
        return acc                                      # (N, out_pad) f32

    # ---- layer 1: ChebConv(F_in -> H) + ReLU ---------------------------------
    h = jnp.maximum(cheb_layer(x_ref[...], w1_ref, b1_ref, f_pad), 0.0)
    # F.dropout(training=False) -> identity.

    # ---- layer 2: ChebConv(H -> C_pad) ---------------------------------------
    y = cheb_layer(h, w2_ref, b2_ref, h_pad)
    # Padded class columns carry bias = -1e30 so they vanish under the softmax.

    # ---- log_softmax over classes (f32, lane-dense width 128) ----------------
    m = jnp.max(y, axis=1, keepdims=True)
    z = y - m
    lse = jnp.log(jnp.sum(jnp.exp(z), axis=1, keepdims=True))
    out_ref[...] = z - lse                              # unmasked 128-wide store


# ------------------------------ wrapper --------------------------------------
def cheb_net_forward(lhat, x, w1, b1, w2, b2):
    """lhat: (N,N), x: (N,F_in), w1: (K,F_in,H), b1: (1,H),
    w2: (K,H,C), b2: (1,C)  ->  (N,C) log-probs."""
    N, f_in = x.shape
    K, _, hidden = w1.shape
    classes = w2.shape[-1]
    f_pad = _round_up(f_in, LANE)
    h_pad = _round_up(hidden, LANE)
    c_pad = _round_up(classes, LANE)

    # Zero-pad all feature dims to 128 (lane-dense vregs, unmasked stores).
    # Padding is exact: zero feature columns stay zero through the Chebyshev
    # recurrence and only ever multiply zero weight rows.
    x_p = jnp.zeros((N, f_pad), jnp.float32).at[:, :f_in].set(x)
    w1_p = jnp.zeros((K, f_pad, h_pad), jnp.float32).at[:, :f_in, :hidden].set(w1)
    w1_p = w1_p.reshape(K * f_pad, h_pad).astype(jnp.bfloat16)   # hop-stacked weight
    b1_p = jnp.zeros((1, h_pad), jnp.float32).at[:, :hidden].set(b1)
    w2_p = jnp.zeros((K, h_pad, c_pad), jnp.float32).at[:, :hidden, :classes].set(w2)
    w2_p = w2_p.reshape(K * h_pad, c_pad).astype(jnp.bfloat16)
    # Padded class columns get a hugely negative bias -> exp() underflows to 0
    # (safe only because the logits / softmax path stays f32 in the kernel).
    b2_p = jnp.full((1, c_pad), -1e30, jnp.float32).at[:, :classes].set(b2)
    lhat_bf = lhat.astype(jnp.bfloat16)

    kernel = functools.partial(_net_kernel, K=K, f_pad=f_pad, h_pad=h_pad)
    vmem = pl.BlockSpec(memory_space=pltpu.MemorySpace.VMEM)

    flops = (2 * (K - 1) * N * N * (f_pad + h_pad)               # propagation (both layers)
             + 2 * N * K * (f_pad * h_pad + h_pad * c_pad))      # per-hop weight matmuls
    bytes_accessed = (lhat_bf.size * 2 + x_p.size * 4 + w1_p.size * 2 + w2_p.size * 2
                      + (b1_p.size + b2_p.size) * 4 + N * c_pad * 4)

    out_p = pl.pallas_call(
        kernel,
        out_shape=jax.ShapeDtypeStruct((N, c_pad), jnp.float32),
        in_specs=[vmem] * 6,               # whole (small) arrays as single VMEM blocks
        out_specs=vmem,
        compiler_params=pltpu.CompilerParams(vmem_limit_bytes=_vmem_limit_bytes()),
        cost_estimate=pl.CostEstimate(flops=int(flops),
                                      transcendentals=int(N * (c_pad + 1)),
                                      bytes_accessed=int(bytes_accessed)),
    )(lhat_bf, x_p, w1_p, b1_p, w2_p, b2_p)
    return out_p[:, :classes]


# ------------------------------ JAX glue -------------------------------------
def scaled_laplacian_dense(edge_index, num_nodes):
    """Dense L_hat = 2L/lambda_max - I with lambda_max=2, sym norm
    => L_hat = -D^{-1/2} A D^{-1/2}, zero diagonal."""
    src, dst = edge_index
    A = jnp.zeros((num_nodes, num_nodes), jnp.float32)
    A = A.at[src, dst].set(1.0)
    A = jnp.maximum(A, A.T)                                     # symmetrize
    A = A * (1.0 - jnp.eye(num_nodes, dtype=jnp.float32))       # drop self loops
    deg = A.sum(axis=1)
    dinv = jnp.where(deg > 0, 1.0 / jnp.sqrt(deg), 0.0)
    S = dinv[:, None] * A * dinv[None, :]
    return -S


def glorot(key, shape):
    fan_in, fan_out = shape[-2], shape[-1]
    limit = jnp.sqrt(6.0 / (fan_in + fan_out))
    return jax.random.uniform(key, shape, jnp.float32, -limit, limit)


if __name__ == "__main__":
    # Small, self-consistent shapes for the Planetoid-style ChebConv net.
    N = 64            # nodes
    F_IN = 16         # dataset.num_features
    HIDDEN = 32       # args.hidden
    CLASSES = 8       # dataset.num_classes
    K = 3             # args.num_hops

    key = jax.random.PRNGKey(0)
    kx, ke, kw1, kw2 = jax.random.split(key, 4)

    # Node features.
    x = jax.random.normal(kx, (N, F_IN), jnp.float32)

    # Deterministic edge_index: a ring plus random chords.
    ring_src = jnp.arange(N, dtype=jnp.int32)
    ring_dst = (ring_src + 1) % N
    rnd_src = jax.random.randint(ke, (2 * N,), 0, N, jnp.int32)
    rnd_dst = jax.random.randint(jax.random.fold_in(ke, 1), (2 * N,), 0, N, jnp.int32)
    edge_index = jnp.stack(
        [jnp.concatenate([ring_src, rnd_src]),
         jnp.concatenate([ring_dst, rnd_dst])], axis=0)

    lhat = scaled_laplacian_dense(edge_index, N)

    # Deterministic ChebConv parameters (glorot weights, zero bias, like PyG reset).
    w1 = glorot(kw1, (K, F_IN, HIDDEN))
    b1 = jnp.zeros((1, HIDDEN), jnp.float32)
    w2 = glorot(kw2, (K, HIDDEN, CLASSES))
    b2 = jnp.zeros((1, CLASSES), jnp.float32)

    fwd = jax.jit(cheb_net_forward)
    out = fwd(lhat, x, w1, b1, w2, b2)
    out = jax.block_until_ready(out)

    # Sanity: log_softmax rows sum to 1 after exp (bf16 MXU operands => loose tol
    # vs. an f32 PyTorch reference; self-consistency checked here).
    row_sums = jnp.exp(out).sum(axis=1)
    assert out.shape == (N, CLASSES)
    assert bool(jnp.all(jnp.abs(row_sums - 1.0) < 1e-4))

    print("KERNEL_OK")
</pallas_src>

<mosaic_0001>
module attributes {stable_mosaic.version = 11 : i64} {
  func.func @_net_kernel(%arg0: memref<64x64xbf16, #tpu.memory_space<vmem>>, %arg1: memref<64x128xf32, #tpu.memory_space<vmem>>, %arg2: memref<384x128xbf16, #tpu.memory_space<vmem>>, %arg3: memref<1x128xf32, #tpu.memory_space<vmem>>, %arg4: memref<384x128xbf16, #tpu.memory_space<vmem>>, %arg5: memref<1x128xf32, #tpu.memory_space<vmem>>, %arg6: memref<64x128xf32, #tpu.memory_space<vmem>>) attributes {dimension_semantics = [], scalar_prefetch = 0 : i64, scratch_operands = 0 : i64, tpu.core_type = #tpu.core_type<tc>} {
    %c0 = arith.constant 0 : index
    %c0_0 = arith.constant 0 : index
    %0 = vector.load %arg0[%c0, %c0_0] : memref<64x64xbf16, #tpu.memory_space<vmem>>, vector<64x64xbf16>
    %c0_1 = arith.constant 0 : index
    %c0_2 = arith.constant 0 : index
    %1 = vector.load %arg1[%c0_1, %c0_2] : memref<64x128xf32, #tpu.memory_space<vmem>>, vector<64x128xf32>
    %2 = arith.truncf %1 : vector<64x128xf32> to vector<64x128xbf16>
    %c0_3 = arith.constant 0 : index
    %c0_4 = arith.constant 0 : index
    %3 = vector.load %arg2[%c0_3, %c0_4] : memref<384x128xbf16, #tpu.memory_space<vmem>>, vector<128x128xbf16>
    %cst = arith.constant dense<0.000000e+00> : vector<64x128xf32>
    %4 = tpu.matmul %2, %3, %cst {dimension_numbers = #tpu.dot_dimension_numbers<[1], [0], [0], [1], [0, 0, 1, 1], [], []>} : vector<64x128xbf16>, vector<128x128xbf16>, vector<64x128xf32> -> vector<64x128xf32>
    %c0_5 = arith.constant 0 : index
    %c0_6 = arith.constant 0 : index
    %5 = vector.load %arg3[%c0_5, %c0_6] : memref<1x128xf32, #tpu.memory_space<vmem>>, vector<1x128xf32>
    %6 = vector.broadcast %5 : vector<1x128xf32> to vector<64x128xf32>
    %7 = arith.addf %4, %6 : vector<64x128xf32>
    %cst_7 = arith.constant dense<0.000000e+00> : vector<64x128xf32>
    %8 = tpu.matmul %0, %2, %cst_7 {dimension_numbers = #tpu.dot_dimension_numbers<[1], [0], [0], [1], [0, 0, 1, 1], [], []>} : vector<64x64xbf16>, vector<64x128xbf16>, vector<64x128xf32> -> vector<64x128xf32>
    %9 = arith.truncf %8 : vector<64x128xf32> to vector<64x128xbf16>
    %c128 = arith.constant 128 : index
    %c0_8 = arith.constant 0 : index
    %10 = vector.load %arg2[%c128, %c0_8] : memref<384x128xbf16, #tpu.memory_space<vmem>>, vector<128x128xbf16>
    %cst_9 = arith.constant dense<0.000000e+00> : vector<64x128xf32>
    %11 = tpu.matmul %9, %10, %cst_9 {dimension_numbers = #tpu.dot_dimension_numbers<[1], [0], [0], [1], [0, 0, 1, 1], [], []>} : vector<64x128xbf16>, vector<128x128xbf16>, vector<64x128xf32> -> vector<64x128xf32>
    %12 = arith.addf %7, %11 : vector<64x128xf32>
    %cst_10 = arith.constant dense<0.000000e+00> : vector<64x128xf32>
    %13 = tpu.matmul %0, %9, %cst_10 {dimension_numbers = #tpu.dot_dimension_numbers<[1], [0], [0], [1], [0, 0, 1, 1], [], []>} : vector<64x64xbf16>, vector<64x128xbf16>, vector<64x128xf32> -> vector<64x128xf32>
    %cst_11 = arith.constant 2.000000e+00 : f32
    %14 = vector.broadcast %cst_11 : f32 to vector<64x128xf32>
    %15 = arith.mulf %14, %13 : vector<64x128xf32>
    %16 = arith.subf %15, %1 : vector<64x128xf32>
    %17 = arith.truncf %16 : vector<64x128xf32> to vector<64x128xbf16>
    %c256 = arith.constant 256 : index
    %c0_12 = arith.constant 0 : index
    %18 = vector.load %arg2[%c256, %c0_12] : memref<384x128xbf16, #tpu.memory_space<vmem>>, vector<128x128xbf16>
    %cst_13 = arith.constant dense<0.000000e+00> : vector<64x128xf32>
    %19 = tpu.matmul %17, %18, %cst_13 {dimension_numbers = #tpu.dot_dimension_numbers<[1], [0], [0], [1], [0, 0, 1, 1], [], []>} : vector<64x128xbf16>, vector<128x128xbf16>, vector<64x128xf32> -> vector<64x128xf32>
    %20 = arith.addf %12, %19 : vector<64x128xf32>
    %cst_14 = arith.constant 0.000000e+00 : f32
    %21 = vector.broadcast %cst_14 : f32 to vector<64x128xf32>
    %22 = arith.maximumf %20, %21 : vector<64x128xf32>
    %23 = arith.truncf %22 : vector<64x128xf32> to vector<64x128xbf16>
    %c0_15 = arith.constant 0 : index
    %c0_16 = arith.constant 0 : index
    %24 = vector.load %arg4[%c0_15, %c0_16] : memref<384x128xbf16, #tpu.memory_space<vmem>>, vector<128x128xbf16>
    %cst_17 = arith.constant dense<0.000000e+00> : vector<64x128xf32>
    %25 = tpu.matmul %23, %24, %cst_17 {dimension_numbers = #tpu.dot_dimension_numbers<[1], [0], [0], [1], [0, 0, 1, 1], [], []>} : vector<64x128xbf16>, vector<128x128xbf16>, vector<64x128xf32> -> vector<64x128xf32>
    %c0_18 = arith.constant 0 : index
    %c0_19 = arith.constant 0 : index
    %26 = vector.load %arg5[%c0_18, %c0_19] : memref<1x128xf32, #tpu.memory_space<vmem>>, vector<1x128xf32>
    %27 = vector.broadcast %26 : vector<1x128xf32> to vector<64x128xf32>
    %28 = arith.addf %25, %27 : vector<64x128xf32>
    %cst_20 = arith.constant dense<0.000000e+00> : vector<64x128xf32>
    %29 = tpu.matmul %0, %23, %cst_20 {dimension_numbers = #tpu.dot_dimension_numbers<[1], [0], [0], [1], [0, 0, 1, 1], [], []>} : vector<64x64xbf16>, vector<64x128xbf16>, vector<64x128xf32> -> vector<64x128xf32>
    %30 = arith.truncf %29 : vector<64x128xf32> to vector<64x128xbf16>
    %c128_21 = arith.constant 128 : index
    %c0_22 = arith.constant 0 : index
    %31 = vector.load %arg4[%c128_21, %c0_22] : memref<384x128xbf16, #tpu.memory_space<vmem>>, vector<128x128xbf16>
    %cst_23 = arith.constant dense<0.000000e+00> : vector<64x128xf32>
    %32 = tpu.matmul %30, %31, %cst_23 {dimension_numbers = #tpu.dot_dimension_numbers<[1], [0], [0], [1], [0, 0, 1, 1], [], []>} : vector<64x128xbf16>, vector<128x128xbf16>, vector<64x128xf32> -> vector<64x128xf32>
    %33 = arith.addf %28, %32 : vector<64x128xf32>
    %cst_24 = arith.constant dense<0.000000e+00> : vector<64x128xf32>
    %34 = tpu.matmul %0, %30, %cst_24 {dimension_numbers = #tpu.dot_dimension_numbers<[1], [0], [0], [1], [0, 0, 1, 1], [], []>} : vector<64x64xbf16>, vector<64x128xbf16>, vector<64x128xf32> -> vector<64x128xf32>
    %cst_25 = arith.constant 2.000000e+00 : f32
    %35 = vector.broadcast %cst_25 : f32 to vector<64x128xf32>
    %36 = arith.mulf %35, %34 : vector<64x128xf32>
    %37 = arith.subf %36, %22 : vector<64x128xf32>
    %38 = arith.truncf %37 : vector<64x128xf32> to vector<64x128xbf16>
    %c256_26 = arith.constant 256 : index
    %c0_27 = arith.constant 0 : index
    %39 = vector.load %arg4[%c256_26, %c0_27] : memref<384x128xbf16, #tpu.memory_space<vmem>>, vector<128x128xbf16>
    %cst_28 = arith.constant dense<0.000000e+00> : vector<64x128xf32>
    %40 = tpu.matmul %38, %39, %cst_28 {dimension_numbers = #tpu.dot_dimension_numbers<[1], [0], [0], [1], [0, 0, 1, 1], [], []>} : vector<64x128xbf16>, vector<128x128xbf16>, vector<64x128xf32> -> vector<64x128xf32>
    %41 = arith.addf %33, %40 : vector<64x128xf32>
    %cst_29 = arith.constant dense<0xFF800000> : vector<64xf32>
    %42 = vector.multi_reduction <maximumf>, %41, %cst_29 [1] : vector<64x128xf32> to vector<64xf32>
    %43 = vector.shape_cast %42 : vector<64xf32> to vector<64x1xf32>
    %44 = vector.broadcast %43 : vector<64x1xf32> to vector<64x128xf32>
    %45 = arith.subf %41, %44 : vector<64x128xf32>
    %46 = math.exp %45 : vector<64x128xf32>
    %cst_30 = arith.constant dense<0.000000e+00> : vector<64xf32>
    %47 = vector.multi_reduction <add>, %46, %cst_30 [1] : vector<64x128xf32> to vector<64xf32>
    %48 = vector.shape_cast %47 : vector<64xf32> to vector<64x1xf32>
    %49 = math.log %48 : vector<64x1xf32>
    %50 = vector.broadcast %49 : vector<64x1xf32> to vector<64x128xf32>
    %51 = arith.subf %45, %50 : vector<64x128xf32>
    %c0_31 = arith.constant 0 : index
    %c0_32 = arith.constant 0 : index
    %52 = vector.load %arg6[%c0_31, %c0_32] : memref<64x128xf32, #tpu.memory_space<vmem>>, vector<64x128xf32>
    tpu.vector_store %arg6[%c0_31, %c0_32], %51 {strides = array<i32>} : memref<64x128xf32, #tpu.memory_space<vmem>>, vector<64x128xf32>,
    return
  }
}

</mosaic_0001>

<llo_original>
// kernel: cheb_net_forward.1
$region0: #{cheb_net_forward.1}
  #allocation0 [shape = 'u32[]', space=smem, size = 0x4, offset = 0x4, fixed_abs, tag = 'smem constant byte address 0x4 - core index']
  #allocation1 [shape = 'u32[144,128]{1,0:T(1,128)}', space=vmem, size = 0x12000, scoped, tag = 'internal scratch']
  %s0 = inlined_call_operand.hbm [shape: bf16[64,64], index: 0, kind: input, shape index: {}]
  %s1 = inlined_call_operand.hbm [shape: f32[64,128], index: 1, kind: input, shape index: {}]
  %s2 = inlined_call_operand.hbm [shape: bf16[384,128], index: 2, kind: input, shape index: {}]
  %s3 = inlined_call_operand.hbm [shape: f32[1,128], index: 3, kind: input, shape index: {}]
  %s4 = inlined_call_operand.hbm [shape: bf16[384,128], index: 4, kind: input, shape index: {}]
  %s5 = inlined_call_operand.hbm [shape: f32[1,128], index: 5, kind: input, shape index: {}]
  %s6 = inlined_call_operand.hbm [shape: f32[64,128], index: 6, kind: output, shape index: {}]
  %s7 = sld [smem:[#allocation0]]
  $region58: #{cheb_net_forward.1} parent=0
    _
  %s9 = ssub.s32 1, %s7
  %s10 = scalar_select 0, %s9, %s7
  $region1: #{cheb_net_forward.1} parent=0
    #allocation2 [shape = 'u8[16384]{0}', space=vmem, size = 0x4000, scoped, tag = 'input window, operand 0, single buffered']
    #allocation3 [shape = 's32[1]{0}', space=sflag, size = 0x4, scoped, tag = 'scoped memory for cheb_net_forward.1']
    #allocation4 [shape = 's32[1]{0}', space=sflag, size = 0x4, scoped, tag = 'scoped memory for cheb_net_forward.1']
    #allocation5 [shape = 'u8[32768]{0}', space=vmem, size = 0x8000, scoped, tag = 'input window, operand 1, single buffered']
    #allocation6 [shape = 's32[1]{0}', space=sflag, size = 0x4, scoped, tag = 'scoped memory for cheb_net_forward.1']
    #allocation7 [shape = 'u8[98304]{0}', space=vmem, size = 0x18000, scoped, tag = 'input window, operand 2, single buffered']
    #allocation8 [shape = 'u8[512]{0}', space=vmem, size = 0x400, scoped, tag = 'input window, operand 3, single buffered']
    #allocation9 [shape = 's32[1]{0}', space=sflag, size = 0x4, scoped, tag = 'scoped memory for cheb_net_forward.1']
    #allocation10 [shape = 'u8[98304]{0}', space=vmem, size = 0x18000, scoped, tag = 'input window, operand 4, single buffered']
    #allocation11 [shape = 'u8[512]{0}', space=vmem, size = 0x400, scoped, tag = 'input window, operand 5, single buffered']
    #allocation12 [shape = 's32[1]{0}', space=sflag, size = 0x4, scoped, tag = 'scoped memory for cheb_net_forward.1']
    #allocation13 [shape = 'u8[32768]{0}', space=vmem, size = 0x8000, scoped, tag = 'output window, operand 0, single buffered']
    %11 = vsyncpa [#allocation3], 0
    %12 = vsyncpa [#allocation6], 0
    %13 = vsyncpa [#allocation9], 0
    %14 = vsyncpa [#allocation12], 0
    %15 = vsyncpa [#allocation4], 0
    // Predicated region
    $region2: #{cheb_net_forward.1} parent=1 // pred_check
      _
    $region3: #{cheb_net_forward.1} parent=1 // pred_check_branch
      %17 = sbr.rel (0) target = $region5
    $region4: #{cheb_net_forward.1} parent=1 // pred_region
      %s19 = ssub.s32 512, 512
      %20 = vsyncadd [#allocation3], %s19
      %s21 = sshll.u32 [#allocation2], 4
      %s22 = int_to_ptr.vmem [resolvable:$true] %s21
      %27 = dma.hbm_to_vmem [thread:$0]  %s0, 512, %s22, [#allocation3], 64, 64, 4
    $region5: #{cheb_net_forward.1} parent=1 // pred_fallthru
      _
    // Predicated region
    $region6: #{cheb_net_forward.1} parent=1 // pred_check
      _
    $region7: #{cheb_net_forward.1} parent=1 // pred_check_branch
      %29 = sbr.rel (0) target = $region9
    $region8: #{cheb_net_forward.1} parent=1 // pred_region
      %s31 = ssub.s32 1024, 1024
      %32 = vsyncadd [#allocation6], %s31
      %s33 = sshll.u32 [#allocation5], 4
      %s34 = int_to_ptr.vmem [resolvable:$true] %s33
      %39 = dma.hbm_to_vmem [thread:$0]  %s1, 1024, %s34, [#allocation6], 128, 128, 8
    $region9: #{cheb_net_forward.1} parent=1 // pred_fallthru
      _
    // Predicated region
    $region10: #{cheb_net_forward.1} parent=1 // pred_check
      _
    $region11: #{cheb_net_forward.1} parent=1 // pred_check_branch
      %41 = sbr.rel (0) target = $region13
    $region12: #{cheb_net_forward.1} parent=1 // pred_region
      %s43 = ssub.s32 3072, 3072
      %44 = vsyncadd [#allocation6], %s43
      %s45 = sshll.u32 [#allocation7], 4
      %s46 = int_to_ptr.vmem [resolvable:$true] %s45
      %51 = dma.hbm_to_vmem [thread:$0]  %s2, 3072, %s46, [#allocation6], 64, 64, 4
    $region13: #{cheb_net_forward.1} parent=1 // pred_fallthru
      _
    // Predicated region
    $region14: #{cheb_net_forward.1} parent=1 // pred_check
      _
    $region15: #{cheb_net_forward.1} parent=1 // pred_check_branch
      %53 = sbr.rel (0) target = $region17
    $region16: #{cheb_net_forward.1} parent=1 // pred_region
      %s55 = ssub.s32 16, 16
      %56 = vsyncadd [#allocation9], %s55
      %s58 = sshll.u32 [#allocation8], 4
      %s59 = int_to_ptr.vmem [resolvable:$true] %s58
      %61 = dma.hbm_to_vmem [thread:$0]  %s3, 16, %s59, [#allocation9]
    $region17: #{cheb_net_forward.1} parent=1 // pred_fallthru
      _
    // Predicated region
    $region18: #{cheb_net_forward.1} parent=1 // pred_check
      _
    $region19: #{cheb_net_forward.1} parent=1 // pred_check_branch
      %63 = sbr.rel (0) target = $region21
    $region20: #{cheb_net_forward.1} parent=1 // pred_region
      %s65 = ssub.s32 3072, 3072
      %66 = vsyncadd [#allocation9], %s65
      %s67 = sshll.u32 [#allocation10], 4
      %s68 = int_to_ptr.vmem [resolvable:$true] %s67
      %73 = dma.hbm_to_vmem [thread:$0]  %s4, 3072, %s68, [#allocation9], 64, 64, 4
    $region21: #{cheb_net_forward.1} parent=1 // pred_fallthru
      _
    // Predicated region
    $region22: #{cheb_net_forward.1} parent=1 // pred_check
      _
    $region23: #{cheb_net_forward.1} parent=1 // pred_check_branch
      %75 = sbr.rel (0) target = $region25
    $region24: #{cheb_net_forward.1} parent=1 // pred_region
      %s77 = ssub.s32 16, 16
      %78 = vsyncadd [#allocation12], %s77
      %s80 = sshll.u32 [#allocation11], 4
      %s81 = int_to_ptr.vmem [resolvable:$true] %s80
      %83 = dma.hbm_to_vmem [thread:$0]  %s5, 16, %s81, [#allocation12]
    $region25: #{cheb_net_forward.1} parent=1 // pred_fallthru
      _
    // Predicated region
    $region26: #{cheb_net_forward.1} parent=1 // pred_check
      _
    $region27: #{cheb_net_forward.1} parent=1 // pred_check_branch
      %85 = sbr.rel (0) target = $region29
    $region28: #{cheb_net_forward.1} parent=1 // pred_region
      %86 = dma.done [#allocation3], 512
    $region29: #{cheb_net_forward.1} parent=1 // pred_fallthru
      _
    // Predicated region
    $region30: #{cheb_net_forward.1} parent=1 // pred_check
      _
    $region31: #{cheb_net_forward.1} parent=1 // pred_check_branch
      %88 = sbr.rel (0) target = $region33
    $region32: #{cheb_net_forward.1} parent=1 // pred_region
      %89 = dma.done [#allocation6], 1024
    $region33: #{cheb_net_forward.1} parent=1 // pred_fallthru
      _
    // Predicated region
    $region34: #{cheb_net_forward.1} parent=1 // pred_check
      _
    $region35: #{cheb_net_forward.1} parent=1 // pred_check_branch
      %91 = sbr.rel (0) target = $region37
    $region36: #{cheb_net_forward.1} parent=1 // pred_region
      %92 = dma.done [#allocation6], 3072
    $region37: #{cheb_net_forward.1} parent=1 // pred_fallthru
      _
    // Predicated region
    $region38: #{cheb_net_forward.1} parent=1 // pred_check
      _
    $region39: #{cheb_net_forward.1} parent=1 // pred_check_branch
      %94 = sbr.rel (0) target = $region41
    $region40: #{cheb_net_forward.1} parent=1 // pred_region
      %95 = dma.done [#allocation9], 16
    $region41: #{cheb_net_forward.1} parent=1 // pred_fallthru
      _
    // Predicated region
    $region42: #{cheb_net_forward.1} parent=1 // pred_check
      _
    $region43: #{cheb_net_forward.1} parent=1 // pred_check_branch
      %97 = sbr.rel (0) target = $region45
    $region44: #{cheb_net_forward.1} parent=1 // pred_region
      %98 = dma.done [#allocation9], 3072
    $region45: #{cheb_net_forward.1} parent=1 // pred_fallthru
      _
    // Predicated region
    $region46: #{cheb_net_forward.1} parent=1 // pred_check
      _
    $region47: #{cheb_net_forward.1} parent=1 // pred_check_branch
      %100 = sbr.rel (0) target = $region49
    $region48: #{cheb_net_forward.1} parent=1 // pred_region
      %101 = dma.done [#allocation12], 16
    $region49: #{cheb_net_forward.1} parent=1 // pred_fallthru
      _
    %v103 = vld [vmem:[#allocation2] sm:$0xf]
    %v104 = vld [vmem:[#allocation2 + $0x4] sm:$0xf]
    %v105 = vld [vmem:[#allocation2 + $0x8] sm:$0xf]
    %v106 = vld [vmem:[#allocation2 + $0xc] sm:$0xf]
    %v107 = vld [vmem:[#allocation2 + $0x10] sm:$0xf]
    %v108 = vld [vmem:[#allocation2 + $0x14] sm:$0xf]
    %v109 = vld [vmem:[#allocation2 + $0x18] sm:$0xf]
    %v110 = vld [vmem:[#allocation2 + $0x1c] sm:$0xf]
    %v111 = vld [vmem:[#allocation5] sm:$0xff]
    %v112 = vld [vmem:[#allocation5 + $0x8] sm:$0xff]
    %v113 = vld [vmem:[#allocation5 + $0x10] sm:$0xff]
    %v114 = vld [vmem:[#allocation5 + $0x18] sm:$0xff]
    %v115 = vld [vmem:[#allocation5 + $0x20] sm:$0xff]
    %v116 = vld [vmem:[#allocation5 + $0x28] sm:$0xff]
    %v117 = vld [vmem:[#allocation5 + $0x30] sm:$0xff]
    %v118 = vld [vmem:[#allocation5 + $0x38] sm:$0xff]
    %v119 = vpack.c.bf16 %v112, %v111
    %v120 = vpack.c.bf16 %v114, %v113
    %v121 = vpack.c.bf16 %v116, %v115
    %v122 = vpack.c.bf16 %v118, %v117
    %v123 = vld [vmem:[#allocation7] sm:$0xf]
    %v124 = vld [vmem:[#allocation7 + $0x4] sm:$0xf]
    %v125 = vld [vmem:[#allocation7 + $0x8] sm:$0xf]
    %v126 = vld [vmem:[#allocation7 + $0xc] sm:$0xf]
    %v127 = vld [vmem:[#allocation7 + $0x10] sm:$0xf]
    %v128 = vld [vmem:[#allocation7 + $0x14] sm:$0xf]
    %v129 = vld [vmem:[#allocation7 + $0x18] sm:$0xf]
    %v130 = vld [vmem:[#allocation7 + $0x1c] sm:$0xf]
    %v131 = vld [vmem:[#allocation7 + $0x20] sm:$0xf]
    %v132 = vld [vmem:[#allocation7 + $0x24] sm:$0xf]
    %v133 = vld [vmem:[#allocation7 + $0x28] sm:$0xf]
    %v134 = vld [vmem:[#allocation7 + $0x2c] sm:$0xf]
    %v135 = vld [vmem:[#allocation7 + $0x30] sm:$0xf]
    %v136 = vld [vmem:[#allocation7 + $0x34] sm:$0xf]
    %v137 = vld [vmem:[#allocation7 + $0x38] sm:$0xf]
    %v138 = vld [vmem:[#allocation7 + $0x3c] sm:$0xf]
    %v139 = vld [vmem:[#allocation8] sm:$0x1]
    %v141 = vlaneseq
    %v142 = vshrl.u32 %v141, 7
    %v143 = vsub.s32 0, %v142
    %v144 = vrot.slane %v139, %v143
    %v162 = vunpack.c.l.b16 %v123
    %v163 = vunpack.c.l.b16 %v124
    %v164 = vunpack.c.l.b16 %v125
    %v165 = vunpack.c.l.b16 %v126
    %v166 = vunpack.c.l.b16 %v127
    %v167 = vunpack.c.l.b16 %v128
    %v168 = vunpack.c.l.b16 %v129
    %v169 = vunpack.c.l.b16 %v130
    %v170 = vunpack.c.l.b16 %v131
    %v171 = vunpack.c.l.b16 %v132
    %v172 = vunpack.c.l.b16 %v133
    %v173 = vunpack.c.l.b16 %v134
    %v174 = vunpack.c.l.b16 %v135
    %v175 = vunpack.c.l.b16 %v136
    %v176 = vunpack.c.l.b16 %v137
    %v177 = vunpack.c.l.b16 %v138
    %v178 = vpack.c.b16 %v163, %v162
    %v179 = vpack.c.b16 %v165, %v164
    %v180 = vpack.c.b16 %v167, %v166
    %v181 = vpack.c.b16 %v169, %v168
    %v182 = vpack.c.b16 %v171, %v170
    %v183 = vpack.c.b16 %v173, %v172
    %v184 = vpack.c.b16 %v175, %v174
    %v185 = vpack.c.b16 %v177, %v176
    %194 = vmatprep.subr.bf16.mxu0 0
    %195 = vmatpush1.bf16.msra.mxu0 %v178
    %196 = vmatprep.subr.bf16.mxu0 0
    %197 = vmatpush1.bf16.msra.mxu0 %v179
    %198 = vmatprep.subr.bf16.mxu0 0
    %199 = vmatpush1.bf16.msra.mxu0 %v180
    %200 = vmatprep.subr.bf16.mxu0 0
    %201 = vmatpush1.bf16.msra.mxu0 %v181
    %202 = vmatprep.subr.bf16.mxu0 0
    %203 = vmatpush1.bf16.msra.mxu0 %v182
    %204 = vmatprep.subr.bf16.mxu0 0
    %205 = vmatpush1.bf16.msra.mxu0 %v183
    %206 = vmatprep.subr.bf16.mxu0 0
    %207 = vmatpush1.bf16.msra.mxu0 %v184
    %208 = vmatprep.subr.bf16.mxu0 0
    %209 = vmatpush1.bf16.msra.mxu0 %v185
    %210 = vmatprep.subr.bf16.mxu0 0
    %211 = vmatpush1.bf16.msra.mxu0 0
    %212 = vmatprep.subr.bf16.mxu0 0
    %213 = vmatpush1.bf16.msra.mxu0 0
    %214 = vmatprep.subr.bf16.mxu0 0
    %215 = vmatpush1.bf16.msra.mxu0 0
    %216 = vmatprep.subr.bf16.mxu0 0
    %217 = vmatpush1.bf16.msra.mxu0 0
    %218 = vmatprep.subr.bf16.mxu0 0
    %219 = vmatpush1.bf16.msra.mxu0 0
    %220 = vmatprep.subr.bf16.mxu0 0
    %221 = vmatpush1.bf16.msra.mxu0 0
    %222 = vmatprep.subr.bf16.mxu0 0
    %223 = vmatpush1.bf16.msra.mxu0 0
    %224 = vmatprep.subr.bf16.mxu0 0
    %225 = vmatpush1.bf16.msra.mxu0 0
    %226 = vmatprep.mubr.bf16.mxu0 0
    %227 = vmatmul.mubr.bf16.gmra.mrb[0].mxu0 %v119
    %v228 = vpop.f32.mrb[0].mxu0
    %v229 = vadd.f32 %v144, %v228
    %v230 = vpop.f32.mrb[0].mxu0
    %v231 = vpop.f32.mrb[0].mxu0
    %v232 = vadd.f32 %v144, %v231
    %v233 = vpop.f32.mrb[0].mxu0
    %234 = vmatprep.mubr.bf16.mxu0 0
    %235 = vmatmul.mubr.bf16.gmra.mrb[0].mxu0 %v120
    %v236 = vpop.f32.mrb[0].mxu0
    %v237 = vadd.f32 %v144, %v236
    %v238 = vpop.f32.mrb[0].mxu0
    %v239 = vpop.f32.mrb[0].mxu0
    %v240 = vadd.f32 %v144, %v239
    %v241 = vpop.f32.mrb[0].mxu0
    %242 = vmatprep.mubr.bf16.mxu0 0
    %243 = vmatmul.mubr.bf16.gmra.mrb[0].mxu0 %v121
    %v244 = vpop.f32.mrb[0].mxu0
    %v245 = vadd.f32 %v144, %v244
    %v246 = vpop.f32.mrb[0].mxu0
    %v247 = vpop.f32.mrb[0].mxu0
    %v248 = vadd.f32 %v144, %v247
    %v249 = vpop.f32.mrb[0].mxu0
    %250 = vmatprep.mubr.bf16.mxu0 0
    %251 = vmatmul.mubr.bf16.gmra.mrb[0].mxu0 %v122
    %v252 = vpop.f32.mrb[0].mxu0
    %v253 = vadd.f32 %v144, %v252
    %v254 = vpop.f32.mrb[0].mxu0
    %v255 = vpop.f32.mrb[0].mxu0
    %v256 = vadd.f32 %v144, %v255
    %v257 = vpop.f32.mrb[0].mxu0
    %258 = vdwg.mxu0
    %v267 = vunpack.c.l.b16 %v103
    %v268 = vunpack.c.l.b16 %v104
    %v269 = vunpack.c.l.b16 %v105
    %v270 = vunpack.c.l.b16 %v106
    %v271 = vunpack.c.l.b16 %v107
    %v272 = vunpack.c.l.b16 %v108
    %v273 = vunpack.c.l.b16 %v109
    %v274 = vunpack.c.l.b16 %v110
    %v275 = vpack.c.b16 %v268, %v267
    %v276 = vpack.c.b16 %v270, %v269
    %v277 = vpack.c.b16 %v272, %v271
    %v278 = vpack.c.b16 %v274, %v273
    %vm279 = vcmask 523264
    %v281 = vsel %vm279, %v275, 0
    %v284 = vsel %vm279, %v276, 0
    %v287 = vsel %vm279, %v277, 0
    %v290 = vsel %vm279, %v278, 0
    %292 = vmatprep.subr.bf16.mxu0 0
    %293 = vmatpush1.bf16.msra.mxu0 %v119
    %294 = vmatprep.subr.bf16.mxu0 0
    %295 = vmatpush1.bf16.msra.mxu0 %v120
    %296 = vmatprep.subr.bf16.mxu0 0
    %297 = vmatpush1.bf16.msra.mxu0 %v121
    %298 = vmatprep.subr.bf16.mxu0 0
    %299 = vmatpush1.bf16.msra.mxu0 %v122
    %300 = vmatprep.subr.bf16.mxu0 0
    %301 = vmatpush1.bf16.msra.mxu0 0
    %302 = vmatprep.subr.bf16.mxu0 0
    %303 = vmatpush1.bf16.msra.mxu0 0
    %304 = vmatprep.subr.bf16.mxu0 0
    %305 = vmatpush1.bf16.msra.mxu0 0
    %306 = vmatprep.subr.bf16.mxu0 0
    %307 = vmatpush1.bf16.msra.mxu0 0
    %308 = vmatprep.subr.bf16.mxu0 0
    %309 = vmatpush1.bf16.msra.mxu0 0
    %310 = vmatprep.subr.bf16.mxu0 0
    %311 = vmatpush1.bf16.msra.mxu0 0
    %312 = vmatprep.subr.bf16.mxu0 0
    %313 = vmatpush1.bf16.msra.mxu0 0
    %314 = vmatprep.subr.bf16.mxu0 0
    %315 = vmatpush1.bf16.msra.mxu0 0
    %316 = vmatprep.subr.bf16.mxu0 0
    %317 = vmatpush1.bf16.msra.mxu0 0
    %318 = vmatprep.subr.bf16.mxu0 0
    %319 = vmatpush1.bf16.msra.mxu0 0
    %320 = vmatprep.subr.bf16.mxu0 0
    %321 = vmatpush1.bf16.msra.mxu0 0
    %322 = vmatprep.subr.bf16.mxu0 0
    %323 = vmatpush1.bf16.msra.mxu0 0
    %324 = vmatprep.mubr.bf16.mxu0 0
    %325 = vmatmul.mubr.bf16.gmra.mrb[0].mxu0 %v281
    %v326 = vpop.f32.mrb[0].mxu0
    %v327 = vadd.f32 0.0, %v326
    %v328 = vpop.f32.mrb[0].mxu0
    %v329 = vpop.f32.mrb[0].mxu0
    %v330 = vadd.f32 0.0, %v329
    %v331 = vpop.f32.mrb[0].mxu0
    %332 = vmatprep.mubr.bf16.mxu0 0
    %333 = vmatmul.mubr.bf16.gmra.mrb[0].mxu0 %v284
    %v334 = vpop.f32.mrb[0].mxu0
    %v335 = vadd.f32 0.0, %v334
    %v336 = vpop.f32.mrb[0].mxu0
    %v337 = vpop.f32.mrb[0].mxu0
    %v338 = vadd.f32 0.0, %v337
    %v339 = vpop.f32.mrb[0].mxu0
    %340 = vmatprep.mubr.bf16.mxu0 0
    %341 = vmatmul.mubr.bf16.gmra.mrb[0].mxu0 %v287
    %v342 = vpop.f32.mrb[0].mxu0
    %v343 = vadd.f32 0.0, %v342
    %v344 = vpop.f32.mrb[0].mxu0
    %v345 = vpop.f32.mrb[0].mxu0
    %v346 = vadd.f32 0.0, %v345
    %v347 = vpop.f32.mrb[0].mxu0
    %348 = vmatprep.mubr.bf16.mxu0 0
    %349 = vmatmul.mubr.bf16.gmra.mrb[0].mxu0 %v290
    %v350 = vpop.f32.mrb[0].mxu0
    %v351 = vadd.f32 0.0, %v350
    %v352 = vpop.f32.mrb[0].mxu0
    %v353 = vpop.f32.mrb[0].mxu0
    %v354 = vadd.f32 0.0, %v353
    %v355 = vpop.f32.mrb[0].mxu0
    %356 = vdwg.mxu0
    %v357 = vpack.c.bf16 %v330, %v327
    %v358 = vpack.c.bf16 %v338, %v335
    %v359 = vpack.c.bf16 %v346, %v343
    %v360 = vpack.c.bf16 %v354, %v351
    %v361 = vld [vmem:[#allocation7 + $0x40] sm:$0xf]
    %v362 = vld [vmem:[#allocation7 + $0x44] sm:$0xf]
    %v363 = vld [vmem:[#allocation7 + $0x48] sm:$0xf]
    %v364 = vld [vmem:[#allocation7 + $0x4c] sm:$0xf]
    %v365 = vld [vmem:[#allocation7 + $0x50] sm:$0xf]
    %v366 = vld [vmem:[#allocation7 + $0x54] sm:$0xf]
    %v367 = vld [vmem:[#allocation7 + $0x58] sm:$0xf]
    %v368 = vld [vmem:[#allocation7 + $0x5c] sm:$0xf]
    %v369 = vld [vmem:[#allocation7 + $0x60] sm:$0xf]
    %v370 = vld [vmem:[#allocation7 + $0x64] sm:$0xf]
    %v371 = vld [vmem:[#allocation7 + $0x68] sm:$0xf]
    %v372 = vld [vmem:[#allocation7 + $0x6c] sm:$0xf]
    %v373 = vld [vmem:[#allocation7 + $0x70] sm:$0xf]
    %v374 = vld [vmem:[#allocation7 + $0x74] sm:$0xf]
    %v375 = vld [vmem:[#allocation7 + $0x78] sm:$0xf]
    %v376 = vld [vmem:[#allocation7 + $0x7c] sm:$0xf]
    %v393 = vunpack.c.l.b16 %v361
    %v394 = vunpack.c.l.b16 %v362
    %v395 = vunpack.c.l.b16 %v363
    %v396 = vunpack.c.l.b16 %v364
    %v397 = vunpack.c.l.b16 %v365
    %v398 = vunpack.c.l.b16 %v366
    %v399 = vunpack.c.l.b16 %v367
    %v400 = vunpack.c.l.b16 %v368
    %v401 = vunpack.c.l.b16 %v369
    %v402 = vunpack.c.l.b16 %v370
    %v403 = vunpack.c.l.b16 %v371
    %v404 = vunpack.c.l.b16 %v372
    %v405 = vunpack.c.l.b16 %v373
    %v406 = vunpack.c.l.b16 %v374
    %v407 = vunpack.c.l.b16 %v375
    %v408 = vunpack.c.l.b16 %v376
    %v409 = vpack.c.b16 %v394, %v393
    %v410 = vpack.c.b16 %v396, %v395
    %v411 = vpack.c.b16 %v398, %v397
    %v412 = vpack.c.b16 %v400, %v399
    %v413 = vpack.c.b16 %v402, %v401
    %v414 = vpack.c.b16 %v404, %v403
    %v415 = vpack.c.b16 %v406, %v405
    %v416 = vpack.c.b16 %v408, %v407
    %425 = vmatprep.subr.bf16.mxu0 0
    %426 = vmatpush1.bf16.msra.mxu0 %v409
    %427 = vmatprep.subr.bf16.mxu0 0
    %428 = vmatpush1.bf16.msra.mxu0 %v410
    %429 = vmatprep.subr.bf16.mxu0 0
    %430 = vmatpush1.bf16.msra.mxu0 %v411
    %431 = vmatprep.subr.bf16.mxu0 0
    %432 = vmatpush1.bf16.msra.mxu0 %v412
    %433 = vmatprep.subr.bf16.mxu0 0
    %434 = vmatpush1.bf16.msra.mxu0 %v413
    %435 = vmatprep.subr.bf16.mxu0 0
    %436 = vmatpush1.bf16.msra.mxu0 %v414
    %437 = vmatprep.subr.bf16.mxu0 0
    %438 = vmatpush1.bf16.msra.mxu0 %v415
    %439 = vmatprep.subr.bf16.mxu0 0
    %440 = vmatpush1.bf16.msra.mxu0 %v416
    %441 = vmatprep.subr.bf16.mxu0 0
    %442 = vmatpush1.bf16.msra.mxu0 0
    %443 = vmatprep.subr.bf16.mxu0 0
    %444 = vmatpush1.bf16.msra.mxu0 0
    %445 = vmatprep.subr.bf16.mxu0 0
    %446 = vmatpush1.bf16.msra.mxu0 0
    %447 = vmatprep.subr.bf16.mxu0 0
    %448 = vmatpush1.bf16.msra.mxu0 0
    %449 = vmatprep.subr.bf16.mxu0 0
    %450 = vmatpush1.bf16.msra.mxu0 0
    %451 = vmatprep.subr.bf16.mxu0 0
    %452 = vmatpush1.bf16.msra.mxu0 0
    %453 = vmatprep.subr.bf16.mxu0 0
    %454 = vmatpush1.bf16.msra.mxu0 0
    %455 = vmatprep.subr.bf16.mxu0 0
    %456 = vmatpush1.bf16.msra.mxu0 0
    %457 = vmatprep.mubr.bf16.mxu0 0
    %458 = vmatmul.mubr.bf16.gmra.mrb[0].mxu0 %v357
    %v459 = vpop.f32.mrb[0].mxu0
    %v460 = vadd.f32 0.0, %v459
    %v461 = vpop.f32.mrb[0].mxu0
    %v462 = vpop.f32.mrb[0].mxu0
    %v463 = vadd.f32 0.0, %v462
    %v464 = vpop.f32.mrb[0].mxu0
    %465 = vmatprep.mubr.bf16.mxu0 0
    %466 = vmatmul.mubr.bf16.gmra.mrb[0].mxu0 %v358
    %v467 = vpop.f32.mrb[0].mxu0
    %v468 = vadd.f32 0.0, %v467
    %v469 = vpop.f32.mrb[0].mxu0
    %v470 = vpop.f32.mrb[0].mxu0
    %v471 = vadd.f32 0.0, %v470
    %v472 = vpop.f32.mrb[0].mxu0
    %473 = vmatprep.mubr.bf16.mxu0 0
    %474 = vmatmul.mubr.bf16.gmra.mrb[0].mxu0 %v359
    %v475 = vpop.f32.mrb[0].mxu0
    %v476 = vadd.f32 0.0, %v475
    %v477 = vpop.f32.mrb[0].mxu0
    %v478 = vpop.f32.mrb[0].mxu0
    %v479 = vadd.f32 0.0, %v478
    %v480 = vpop.f32.mrb[0].mxu0
    %481 = vmatprep.mubr.bf16.mxu0 0
    %482 = vmatmul.mubr.bf16.gmra.mrb[0].mxu0 %v360
    %v483 = vpop.f32.mrb[0].mxu0
    %v484 = vadd.f32 0.0, %v483
    %v485 = vpop.f32.mrb[0].mxu0
    %v486 = vpop.f32.mrb[0].mxu0
    %v487 = vadd.f32 0.0, %v486
    %v488 = vpop.f32.mrb[0].mxu0
    %489 = vdwg.mxu0
    %v490 = vadd.f32 %v229, %v460
    %v491 = vadd.f32 %v232, %v463
    %v492 = vadd.f32 %v237, %v468
    %v493 = vadd.f32 %v240, %v471
    %v494 = vadd.f32 %v245, %v476
    %v495 = vadd.f32 %v248, %v479
    %v496 = vadd.f32 %v253, %v484
    %v497 = vadd.f32 %v256, %v487
    %498 = vmatprep.subr.bf16.mxu0 0
    %499 = vmatpush1.bf16.msra.mxu0 %v357
    %500 = vmatprep.subr.bf16.mxu0 0
    %501 = vmatpush1.bf16.msra.mxu0 %v358
    %502 = vmatprep.subr.bf16.mxu0 0
    %503 = vmatpush1.bf16.msra.mxu0 %v359
    %504 = vmatprep.subr.bf16.mxu0 0
    %505 = vmatpush1.bf16.msra.mxu0 %v360
    %506 = vmatprep.subr.bf16.mxu0 0
    %507 = vmatpush1.bf16.msra.mxu0 0
    %508 = vmatprep.subr.bf16.mxu0 0
    %509 = vmatpush1.bf16.msra.mxu0 0
    %510 = vmatprep.subr.bf16.mxu0 0
    %511 = vmatpush1.bf16.msra.mxu0 0
    %512 = vmatprep.subr.bf16.mxu0 0
    %513 = vmatpush1.bf16.msra.mxu0 0
    %514 = vmatprep.subr.bf16.mxu0 0
    %515 = vmatpush1.bf16.msra.mxu0 0
    %516 = vmatprep.subr.bf16.mxu0 0
    %517 = vmatpush1.bf16.msra.mxu0 0
    %518 = vmatprep.subr.bf16.mxu0 0
    %519 = vmatpush1.bf16.msra.mxu0 0
    %520 = vmatprep.subr.bf16.mxu0 0
    %521 = vmatpush1.bf16.msra.mxu0 0
    %522 = vmatprep.subr.bf16.mxu0 0
    %523 = vmatpush1.bf16.msra.mxu0 0
    %524 = vmatprep.subr.bf16.mxu0 0
    %525 = vmatpush1.bf16.msra.mxu0 0
    %526 = vmatprep.subr.bf16.mxu0 0
    %527 = vmatpush1.bf16.msra.mxu0 0
    %528 = vmatprep.subr.bf16.mxu0 0
    %529 = vmatpush1.bf16.msra.mxu0 0
    %530 = vmatprep.mubr.bf16.mxu0 0
    %531 = vmatmul.mubr.bf16.gmra.mrb[0].mxu0 %v281
    %v532 = vpop.f32.mrb[0].mxu0
    %v533 = vadd.f32 0.0, %v532
    %v534 = vpop.f32.mrb[0].mxu0
    %v535 = vpop.f32.mrb[0].mxu0
    %v536 = vadd.f32 0.0, %v535
    %v537 = vpop.f32.mrb[0].mxu0
    %538 = vmatprep.mubr.bf16.mxu0 0
    %539 = vmatmul.mubr.bf16.gmra.mrb[0].mxu0 %v284
    %v540 = vpop.f32.mrb[0].mxu0
    %v541 = vadd.f32 0.0, %v540
    %v542 = vpop.f32.mrb[0].mxu0
    %v543 = vpop.f32.mrb[0].mxu0
    %v544 = vadd.f32 0.0, %v543
    %v545 = vpop.f32.mrb[0].mxu0
    %546 = vmatprep.mubr.bf16.mxu0 0
    %547 = vmatmul.mubr.bf16.gmra.mrb[0].mxu0 %v287
    %v548 = vpop.f32.mrb[0].mxu0
    %v549 = vadd.f32 0.0, %v548
    %v550 = vpop.f32.mrb[0].mxu0
    %v551 = vpop.f32.mrb[0].mxu0
    %v552 = vadd.f32 0.0, %v551
    %v553 = vpop.f32.mrb[0].mxu0
    %554 = vmatprep.mubr.bf16.mxu0 0
    %555 = vmatmul.mubr.bf16.gmra.mrb[0].mxu0 %v290
    %v556 = vpop.f32.mrb[0].mxu0
    %v557 = vadd.f32 0.0, %v556
    %v558 = vpop.f32.mrb[0].mxu0
    %v559 = vpop.f32.mrb[0].mxu0
    %v560 = vadd.f32 0.0, %v559
    %v561 = vpop.f32.mrb[0].mxu0
    %562 = vdwg.mxu0
    %v563 = vmul.f32 %v533, 2.0
    %v564 = vmul.f32 %v536, 2.0
    %v565 = vmul.f32 %v541, 2.0
    %v566 = vmul.f32 %v544, 2.0
    %v567 = vmul.f32 %v549, 2.0
    %v568 = vmul.f32 %v552, 2.0
    %v569 = vmul.f32 %v557, 2.0
    %v570 = vmul.f32 %v560, 2.0
    %v571 = vsub.f32 %v563, %v111
    %v572 = vsub.f32 %v564, %v112
    %v573 = vsub.f32 %v565, %v113
    %v574 = vsub.f32 %v566, %v114
    %v575 = vsub.f32 %v567, %v115
    %v576 = vsub.f32 %v568, %v116
    %v577 = vsub.f32 %v569, %v117
    %v578 = vsub.f32 %v570, %v118
    %v579 = vpack.c.bf16 %v572, %v571
    %v580 = vpack.c.bf16 %v574, %v573
    %v581 = vpack.c.bf16 %v576, %v575
    %v582 = vpack.c.bf16 %v578, %v577
    %v583 = vld [vmem:[#allocation7 + $0x80] sm:$0xf]
    %v584 = vld [vmem:[#allocation7 + $0x84] sm:$0xf]
    %v585 = vld [vmem:[#allocation7 + $0x88] sm:$0xf]
    %v586 = vld [vmem:[#allocation7 + $0x8c] sm:$0xf]
    %v587 = vld [vmem:[#allocation7 + $0x90] sm:$0xf]
    %v588 = vld [vmem:[#allocation7 + $0x94] sm:$0xf]
    %v589 = vld [vmem:[#allocation7 + $0x98] sm:$0xf]
    %v590 = vld [vmem:[#allocation7 + $0x9c] sm:$0xf]
    %v591 = vld [vmem:[#allocation7 + $0xa0] sm:$0xf]
    %v592 = vld [vmem:[#allocation7 + $0xa4] sm:$0xf]
    %v593 = vld [vmem:[#allocation7 + $0xa8] sm:$0xf]
    %v594 = vld [vmem:[#allocation7 + $0xac] sm:$0xf]
    %v595 = vld [vmem:[#allocation7 + $0xb0] sm:$0xf]
    %v596 = vld [vmem:[#allocation7 + $0xb4] sm:$0xf]
    %v597 = vld [vmem:[#allocation7 + $0xb8] sm:$0xf]
    %v598 = vld [vmem:[#allocation7 + $0xbc] sm:$0xf]
    %v615 = vunpack.c.l.b16 %v583
    %v616 = vunpack.c.l.b16 %v584
    %v617 = vunpack.c.l.b16 %v585
    %v618 = vunpack.c.l.b16 %v586
    %v619 = vunpack.c.l.b16 %v587
    %v620 = vunpack.c.l.b16 %v588
    %v621 = vunpack.c.l.b16 %v589
    %v622 = vunpack.c.l.b16 %v590
    %v623 = vunpack.c.l.b16 %v591
    %v624 = vunpack.c.l.b16 %v592
    %v625 = vunpack.c.l.b16 %v593
    %v626 = vunpack.c.l.b16 %v594
    %v627 = vunpack.c.l.b16 %v595
    %v628 = vunpack.c.l.b16 %v596
    %v629 = vunpack.c.l.b16 %v597
    %v630 = vunpack.c.l.b16 %v598
    %v631 = vpack.c.b16 %v616, %v615
    %v632 = vpack.c.b16 %v618, %v617
    %v633 = vpack.c.b16 %v620, %v619
    %v634 = vpack.c.b16 %v622, %v621
    %v635 = vpack.c.b16 %v624, %v623
    %v636 = vpack.c.b16 %v626, %v625
    %v637 = vpack.c.b16 %v628, %v627
    %v638 = vpack.c.b16 %v630, %v629
    %647 = vmatprep.subr.bf16.mxu0 0
    %648 = vmatpush1.bf16.msra.mxu0 %v631
    %649 = vmatprep.subr.bf16.mxu0 0
    %650 = vmatpush1.bf16.msra.mxu0 %v632
    %651 = vmatprep.subr.bf16.mxu0 0
    %652 = vmatpush1.bf16.msra.mxu0 %v633
    %653 = vmatprep.subr.bf16.mxu0 0
    %654 = vmatpush1.bf16.msra.mxu0 %v634
    %655 = vmatprep.subr.bf16.mxu0 0
    %656 = vmatpush1.bf16.msra.mxu0 %v635
    %657 = vmatprep.subr.bf16.mxu0 0
    %658 = vmatpush1.bf16.msra.mxu0 %v636
    %659 = vmatprep.subr.bf16.mxu0 0
    %660 = vmatpush1.bf16.msra.mxu0 %v637
    %661 = vmatprep.subr.bf16.mxu0 0
    %662 = vmatpush1.bf16.msra.mxu0 %v638
    %663 = vmatprep.subr.bf16.mxu0 0
    %664 = vmatpush1.bf16.msra.mxu0 0
    %665 = vmatprep.subr.bf16.mxu0 0
    %666 = vmatpush1.bf16.msra.mxu0 0
    %667 = vmatprep.subr.bf16.mxu0 0
    %668 = vmatpush1.bf16.msra.mxu0 0
    %669 = vmatprep.subr.bf16.mxu0 0
    %670 = vmatpush1.bf16.msra.mxu0 0
    %671 = vmatprep.subr.bf16.mxu0 0
    %672 = vmatpush1.bf16.msra.mxu0 0
    %673 = vmatprep.subr.bf16.mxu0 0
    %674 = vmatpush1.bf16.msra.mxu0 0
    %675 = vmatprep.subr.bf16.mxu0 0
    %676 = vmatpush1.bf16.msra.mxu0 0
    %677 = vmatprep.subr.bf16.mxu0 0
    %678 = vmatpush1.bf16.msra.mxu0 0
    %679 = vmatprep.mubr.bf16.mxu0 0
    %680 = vmatmul.mubr.bf16.gmra.mrb[0].mxu0 %v579
    %v681 = vpop.f32.mrb[0].mxu0
    %v682 = vadd.f32 0.0, %v681
    %v683 = vpop.f32.mrb[0].mxu0
    %v684 = vpop.f32.mrb[0].mxu0
    %v685 = vadd.f32 0.0, %v684
    %v686 = vpop.f32.mrb[0].mxu0
    %687 = vmatprep.mubr.bf16.mxu0 0
    %688 = vmatmul.mubr.bf16.gmra.mrb[0].mxu0 %v580
    %v689 = vpop.f32.mrb[0].mxu0
    %v690 = vadd.f32 0.0, %v689
    %v691 = vpop.f32.mrb[0].mxu0
    %v692 = vpop.f32.mrb[0].mxu0
    %v693 = vadd.f32 0.0, %v692
    %v694 = vpop.f32.mrb[0].mxu0
    %695 = vmatprep.mubr.bf16.mxu0 0
    %696 = vmatmul.mubr.bf16.gmra.mrb[0].mxu0 %v581
    %v697 = vpop.f32.mrb[0].mxu0
    %v698 = vadd.f32 0.0, %v697
    %v699 = vpop.f32.mrb[0].mxu0
    %v700 = vpop.f32.mrb[0].mxu0
    %v701 = vadd.f32 0.0, %v700
    %v702 = vpop.f32.mrb[0].mxu0
    %703 = vmatprep.mubr.bf16.mxu0 0
    %704 = vmatmul.mubr.bf16.gmra.mrb[0].mxu0 %v582
    %v705 = vpop.f32.mrb[0].mxu0
    %v706 = vadd.f32 0.0, %v705
    %v707 = vpop.f32.mrb[0].mxu0
    %v708 = vpop.f32.mrb[0].mxu0
    %v709 = vadd.f32 0.0, %v708
    %v710 = vpop.f32.mrb[0].mxu0
    %711 = vdwg.mxu0
    %v712 = vadd.f32 %v490, %v682
    %v713 = vadd.f32 %v491, %v685
    %v714 = vadd.f32 %v492, %v690
    %v715 = vadd.f32 %v493, %v693
    %v716 = vadd.f32 %v494, %v698
    %v717 = vadd.f32 %v495, %v701
    %v718 = vadd.f32 %v496, %v706
    %v719 = vadd.f32 %v497, %v709
    %v720 = vmax.f32 %v712, 0.0
    %v721 = vmax.f32 %v713, 0.0
    %v722 = vmax.f32 %v714, 0.0
    %v723 = vmax.f32 %v715, 0.0
    %v724 = vmax.f32 %v716, 0.0
    %v725 = vmax.f32 %v717, 0.0
    %v726 = vmax.f32 %v718, 0.0
    %v727 = vmax.f32 %v719, 0.0
    %v728 = vpack.c.bf16 %v721, %v720
    %v729 = vpack.c.bf16 %v723, %v722
    %v730 = vpack.c.bf16 %v725, %v724
    %v731 = vpack.c.bf16 %v727, %v726
    %v732 = vld [vmem:[#allocation10] sm:$0xf]
    %v733 = vld [vmem:[#allocation10 + $0x4] sm:$0xf]
    %v734 = vld [vmem:[#allocation10 + $0x8] sm:$0xf]
    %v735 = vld [vmem:[#allocation10 + $0xc] sm:$0xf]
    %v736 = vld [vmem:[#allocation10 + $0x10] sm:$0xf]
    %v737 = vld [vmem:[#allocation10 + $0x14] sm:$0xf]
    %v738 = vld [vmem:[#allocation10 + $0x18] sm:$0xf]
    %v739 = vld [vmem:[#allocation10 + $0x1c] sm:$0xf]
    %v740 = vld [vmem:[#allocation10 + $0x20] sm:$0xf]
    %v741 = vld [vmem:[#allocation10 + $0x24] sm:$0xf]
    %v742 = vld [vmem:[#allocation10 + $0x28] sm:$0xf]
    %v743 = vld [vmem:[#allocation10 + $0x2c] sm:$0xf]
    %v744 = vld [vmem:[#allocation10 + $0x30] sm:$0xf]
    %v745 = vld [vmem:[#allocation10 + $0x34] sm:$0xf]
    %v746 = vld [vmem:[#allocation10 + $0x38] sm:$0xf]
    %v747 = vld [vmem:[#allocation10 + $0x3c] sm:$0xf]
    %v748 = vld [vmem:[#allocation11] sm:$0x1]
    %v750 = vlaneseq
    %v751 = vshrl.u32 %v750, 7
    %v752 = vsub.s32 0, %v751
    %v753 = vrot.slane %v748, %v752
    %v771 = vunpack.c.l.b16 %v732
    %v772 = vunpack.c.l.b16 %v733
    %v773 = vunpack.c.l.b16 %v734
    %v774 = vunpack.c.l.b16 %v735
    %v775 = vunpack.c.l.b16 %v736
    %v776 = vunpack.c.l.b16 %v737
    %v777 = vunpack.c.l.b16 %v738
    %v778 = vunpack.c.l.b16 %v739
    %v779 = vunpack.c.l.b16 %v740
    %v780 = vunpack.c.l.b16 %v741
    %v781 = vunpack.c.l.b16 %v742
    %v782 = vunpack.c.l.b16 %v743
    %v783 = vunpack.c.l.b16 %v744
    %v784 = vunpack.c.l.b16 %v745
    %v785 = vunpack.c.l.b16 %v746
    %v786 = vunpack.c.l.b16 %v747
    %v787 = vpack.c.b16 %v772, %v771
    %v788 = vpack.c.b16 %v774, %v773
    %v789 = vpack.c.b16 %v776, %v775
    %v790 = vpack.c.b16 %v778, %v777
    %v791 = vpack.c.b16 %v780, %v779
    %v792 = vpack.c.b16 %v782, %v781
    %v793 = vpack.c.b16 %v784, %v783
    %v794 = vpack.c.b16 %v786, %v785
    %803 = vmatprep.subr.bf16.mxu0 0
    %804 = vmatpush1.bf16.msra.mxu0 %v787
    %805 = vmatprep.subr.bf16.mxu0 0
    %806 = vmatpush1.bf16.msra.mxu0 %v788
    %807 = vmatprep.subr.bf16.mxu0 0
    %808 = vmatpush1.bf16.msra.mxu0 %v789
    %809 = vmatprep.subr.bf16.mxu0 0
    %810 = vmatpush1.bf16.msra.mxu0 %v790
    %811 = vmatprep.subr.bf16.mxu0 0
    %812 = vmatpush1.bf16.msra.mxu0 %v791
    %813 = vmatprep.subr.bf16.mxu0 0
    %814 = vmatpush1.bf16.msra.mxu0 %v792
    %815 = vmatprep.subr.bf16.mxu0 0
    %816 = vmatpush1.bf16.msra.mxu0 %v793
    %817 = vmatprep.subr.bf16.mxu0 0
    %818 = vmatpush1.bf16.msra.mxu0 %v794
    %819 = vmatprep.subr.bf16.mxu0 0
    %820 = vmatpush1.bf16.msra.mxu0 0
    %821 = vmatprep.subr.bf16.mxu0 0
    %822 = vmatpush1.bf16.msra.mxu0 0
    %823 = vmatprep.subr.bf16.mxu0 0
    %824 = vmatpush1.bf16.msra.mxu0 0
    %825 = vmatprep.subr.bf16.mxu0 0
    %826 = vmatpush1.bf16.msra.mxu0 0
    %827 = vmatprep.subr.bf16.mxu0 0
    %828 = vmatpush1.bf16.msra.mxu0 0
    %829 = vmatprep.subr.bf16.mxu0 0
    %830 = vmatpush1.bf16.msra.mxu0 0
    %831 = vmatprep.subr.bf16.mxu0 0
    %832 = vmatpush1.bf16.msra.mxu0 0
    %833 = vmatprep.subr.bf16.mxu0 0
    %834 = vmatpush1.bf16.msra.mxu0 0
    %835 = vmatprep.mubr.bf16.mxu0 0
    %836 = vmatmul.mubr.bf16.gmra.mrb[0].mxu0 %v728
    %v837 = vpop.f32.mrb[0].mxu0
    %v838 = vadd.f32 %v753, %v837
    %v839 = vpop.f32.mrb[0].mxu0
    %v840 = vpop.f32.mrb[0].mxu0
    %v841 = vadd.f32 %v753, %v840
    %v842 = vpop.f32.mrb[0].mxu0
    %843 = vmatprep.mubr.bf16.mxu0 0
    %844 = vmatmul.mubr.bf16.gmra.mrb[0].mxu0 %v729
    %v845 = vpop.f32.mrb[0].mxu0
    %v846 = vadd.f32 %v753, %v845
    %v847 = vpop.f32.mrb[0].mxu0
    %v848 = vpop.f32.mrb[0].mxu0
    %v849 = vadd.f32 %v753, %v848
    %v850 = vpop.f32.mrb[0].mxu0
    %851 = vmatprep.mubr.bf16.mxu0 0
    %852 = vmatmul.mubr.bf16.gmra.mrb[0].mxu0 %v730
    %v853 = vpop.f32.mrb[0].mxu0
    %v854 = vadd.f32 %v753, %v853
    %v855 = vpop.f32.mrb[0].mxu0
    %v856 = vpop.f32.mrb[0].mxu0
    %v857 = vadd.f32 %v753, %v856
    %v858 = vpop.f32.mrb[0].mxu0
    %859 = vmatprep.mubr.bf16.mxu0 0
    %860 = vmatmul.mubr.bf16.gmra.mrb[0].mxu0 %v731
    %v861 = vpop.f32.mrb[0].mxu0
    %v862 = vadd.f32 %v753, %v861
    %v863 = vpop.f32.mrb[0].mxu0
    %v864 = vpop.f32.mrb[0].mxu0
    %v865 = vadd.f32 %v753, %v864
    %v866 = vpop.f32.mrb[0].mxu0
    %867 = vdwg.mxu0
    %868 = vmatprep.subr.bf16.mxu0 0
    %869 = vmatpush1.bf16.msra.mxu0 %v728
    %870 = vmatprep.subr.bf16.mxu0 0
    %871 = vmatpush1.bf16.msra.mxu0 %v729
    %872 = vmatprep.subr.bf16.mxu0 0
    %873 = vmatpush1.bf16.msra.mxu0 %v730
    %874 = vmatprep.subr.bf16.mxu0 0
    %875 = vmatpush1.bf16.msra.mxu0 %v731
    %876 = vmatprep.subr.bf16.mxu0 0
    %877 = vmatpush1.bf16.msra.mxu0 0
    %878 = vmatprep.subr.bf16.mxu0 0
    %879 = vmatpush1.bf16.msra.mxu0 0
    %880 = vmatprep.subr.bf16.mxu0 0
    %881 = vmatpush1.bf16.msra.mxu0 0
    %882 = vmatprep.subr.bf16.mxu0 0
    %883 = vmatpush1.bf16.msra.mxu0 0
    %884 = vmatprep.subr.bf16.mxu0 0
    %885 = vmatpush1.bf16.msra.mxu0 0
    %886 = vmatprep.subr.bf16.mxu0 0
    %887 = vmatpush1.bf16.msra.mxu0 0
    %888 = vmatprep.subr.bf16.mxu0 0
    %889 = vmatpush1.bf16.msra.mxu0 0
    %890 = vmatprep.subr.bf16.mxu0 0
    %891 = vmatpush1.bf16.msra.mxu0 0
    %892 = vmatprep.subr.bf16.mxu0 0
    %893 = vmatpush1.bf16.msra.mxu0 0
    %894 = vmatprep.subr.bf16.mxu0 0
    %895 = vmatpush1.bf16.msra.mxu0 0
    %896 = vmatprep.subr.bf16.mxu0 0
    %897 = vmatpush1.bf16.msra.mxu0 0
    %898 = vmatprep.subr.bf16.mxu0 0
    %899 = vmatpush1.bf16.msra.mxu0 0
    %900 = vmatprep.mubr.bf16.mxu0 0
    %901 = vmatmul.mubr.bf16.gmra.mrb[0].mxu0 %v281
    %v902 = vpop.f32.mrb[0].mxu0
    %v903 = vadd.f32 0.0, %v902
    %v904 = vpop.f32.mrb[0].mxu0
    %v905 = vpop.f32.mrb[0].mxu0
    %v906 = vadd.f32 0.0, %v905
    %v907 = vpop.f32.mrb[0].mxu0
    %908 = vmatprep.mubr.bf16.mxu0 0
    %909 = vmatmul.mubr.bf16.gmra.mrb[0].mxu0 %v284
    %v910 = vpop.f32.mrb[0].mxu0
    %v911 = vadd.f32 0.0, %v910
    %v912 = vpop.f32.mrb[0].mxu0
    %v913 = vpop.f32.mrb[0].mxu0
    %v914 = vadd.f32 0.0, %v913
    %v915 = vpop.f32.mrb[0].mxu0
    %916 = vmatprep.mubr.bf16.mxu0 0
    %917 = vmatmul.mubr.bf16.gmra.mrb[0].mxu0 %v287
    %v918 = vpop.f32.mrb[0].mxu0
    %v919 = vadd.f32 0.0, %v918
    %v920 = vpop.f32.mrb[0].mxu0
    %v921 = vpop.f32.mrb[0].mxu0
    %v922 = vadd.f32 0.0, %v921
    %v923 = vpop.f32.mrb[0].mxu0
    %924 = vmatprep.mubr.bf16.mxu0 0
    %925 = vmatmul.mubr.bf16.gmra.mrb[0].mxu0 %v290
    %v926 = vpop.f32.mrb[0].mxu0
    %v927 = vadd.f32 0.0, %v926
    %v928 = vpop.f32.mrb[0].mxu0
    %v929 = vpop.f32.mrb[0].mxu0
    %v930 = vadd.f32 0.0, %v929
    %v931 = vpop.f32.mrb[0].mxu0
    %932 = vdwg.mxu0
    %v933 = vpack.c.bf16 %v906, %v903
    %v934 = vpack.c.bf16 %v914, %v911
    %v935 = vpack.c.bf16 %v922, %v919
    %v936 = vpack.c.bf16 %v930, %v927
    %v937 = vld [vmem:[#allocation10 + $0x40] sm:$0xf]
    %v938 = vld [vmem:[#allocation10 + $0x44] sm:$0xf]
    %v939 = vld [vmem:[#allocation10 + $0x48] sm:$0xf]
    %v940 = vld [vmem:[#allocation10 + $0x4c] sm:$0xf]
    %v941 = vld [vmem:[#allocation10 + $0x50] sm:$0xf]
    %v942 = vld [vmem:[#allocation10 + $0x54] sm:$0xf]
    %v943 = vld [vmem:[#allocation10 + $0x58] sm:$0xf]
    %v944 = vld [vmem:[#allocation10 + $0x5c] sm:$0xf]
    %v945 = vld [vmem:[#allocation10 + $0x60] sm:$0xf]
    %v946 = vld [vmem:[#allocation10 + $0x64] sm:$0xf]
    %v947 = vld [vmem:[#allocation10 + $0x68] sm:$0xf]
    %v948 = vld [vmem:[#allocation10 + $0x6c] sm:$0xf]
    %v949 = vld [vmem:[#allocation10 + $0x70] sm:$0xf]
    %v950 = vld [vmem:[#allocation10 + $0x74] sm:$0xf]
    %v951 = vld [vmem:[#allocation10 + $0x78] sm:$0xf]
    %v952 = vld [vmem:[#allocation10 + $0x7c] sm:$0xf]
    %v969 = vunpack.c.l.b16 %v937
    %v970 = vunpack.c.l.b16 %v938
    %v971 = vunpack.c.l.b16 %v939
    %v972 = vunpack.c.l.b16 %v940
    %v973 = vunpack.c.l.b16 %v941
    %v974 = vunpack.c.l.b16 %v942
    %v975 = vunpack.c.l.b16 %v943
    %v976 = vunpack.c.l.b16 %v944
    %v977 = vunpack.c.l.b16 %v945
    %v978 = vunpack.c.l.b16 %v946
    %v979 = vunpack.c.l.b16 %v947
    %v980 = vunpack.c.l.b16 %v948
    %v981 = vunpack.c.l.b16 %v949
    %v982 = vunpack.c.l.b16 %v950
    %v983 = vunpack.c.l.b16 %v951
    %v984 = vunpack.c.l.b16 %v952
    %v985 = vpack.c.b16 %v970, %v969
    %v986 = vpack.c.b16 %v972, %v971
    %v987 = vpack.c.b16 %v974, %v973
    %v988 = vpack.c.b16 %v976, %v975
    %v989 = vpack.c.b16 %v978, %v977
    %v990 = vpack.c.b16 %v980, %v979
    %v991 = vpack.c.b16 %v982, %v981
    %v992 = vpack.c.b16 %v984, %v983
    %1001 = vmatprep.subr.bf16.mxu0 0
    %1002 = vmatpush1.bf16.msra.mxu0 %v985
    %1003 = vmatprep.subr.bf16.mxu0 0
    %1004 = vmatpush1.bf16.msra.mxu0 %v986
    %1005 = vmatprep.subr.bf16.mxu0 0
    %1006 = vmatpush1.bf16.msra.mxu0 %v987
    %1007 = vmatprep.subr.bf16.mxu0 0
    %1008 = vmatpush1.bf16.msra.mxu0 %v988
    %1009 = vmatprep.subr.bf16.mxu0 0
    %1010 = vmatpush1.bf16.msra.mxu0 %v989
    %1011 = vmatprep.subr.bf16.mxu0 0
    %1012 = vmatpush1.bf16.msra.mxu0 %v990
    %1013 = vmatprep.subr.bf16.mxu0 0
    %1014 = vmatpush1.bf16.msra.mxu0 %v991
    %1015 = vmatprep.subr.bf16.mxu0 0
    %1016 = vmatpush1.bf16.msra.mxu0 %v992
    %1017 = vmatprep.subr.bf16.mxu0 0
    %1018 = vmatpush1.bf16.msra.mxu0 0
    %1019 = vmatprep.subr.bf16.mxu0 0
    %1020 = vmatpush1.bf16.msra.mxu0 0
    %1021 = vmatprep.subr.bf16.mxu0 0
    %1022 = vmatpush1.bf16.msra.mxu0 0
    %1023 = vmatprep.subr.bf16.mxu0 0
    %1024 = vmatpush1.bf16.msra.mxu0 0
    %1025 = vmatprep.subr.bf16.mxu0 0
    %1026 = vmatpush1.bf16.msra.mxu0 0
    %1027 = vmatprep.subr.bf16.mxu0 0
    %1028 = vmatpush1.bf16.msra.mxu0 0
    %1029 = vmatprep.subr.bf16.mxu0 0
    %1030 = vmatpush1.bf16.msra.mxu0 0
    %1031 = vmatprep.subr.bf16.mxu0 0
    %1032 = vmatpush1.bf16.msra.mxu0 0
    %1033 = vmatprep.mubr.bf16.mxu0 0
    %1034 = vmatmul.mubr.bf16.gmra.mrb[0].mxu0 %v933
    %v1035 = vpop.f32.mrb[0].mxu0
    %v1036 = vadd.f32 0.0, %v1035
    %v1037 = vpop.f32.mrb[0].mxu0
    %v1038 = vpop.f32.mrb[0].mxu0
    %v1039 = vadd.f32 0.0, %v1038
    %v1040 = vpop.f32.mrb[0].mxu0
    %1041 = vmatprep.mubr.bf16.mxu0 0
    %1042 = vmatmul.mubr.bf16.gmra.mrb[0].mxu0 %v934
    %v1043 = vpop.f32.mrb[0].mxu0
    %v1044 = vadd.f32 0.0, %v1043
    %v1045 = vpop.f32.mrb[0].mxu0
    %v1046 = vpop.f32.mrb[0].mxu0
    %v1047 = vadd.f32 0.0, %v1046
    %v1048 = vpop.f32.mrb[0].mxu0
    %1049 = vmatprep.mubr.bf16.mxu0 0
    %1050 = vmatmul.mubr.bf16.gmra.mrb[0].mxu0 %v935
    %v1051 = vpop.f32.mrb[0].mxu0
    %v1052 = vadd.f32 0.0, %v1051
    %v1053 = vpop.f32.mrb[0].mxu0
    %v1054 = vpop.f32.mrb[0].mxu0
    %v1055 = vadd.f32 0.0, %v1054
    %v1056 = vpop.f32.mrb[0].mxu0
    %1057 = vmatprep.mubr.bf16.mxu0 0
    %1058 = vmatmul.mubr.bf16.gmra.mrb[0].mxu0 %v936
    %v1059 = vpop.f32.mrb[0].mxu0
    %v1060 = vadd.f32 0.0, %v1059
    %v1061 = vpop.f32.mrb[0].mxu0
    %v1062 = vpop.f32.mrb[0].mxu0
    %v1063 = vadd.f32 0.0, %v1062
    %v1064 = vpop.f32.mrb[0].mxu0
    %1065 = vdwg.mxu0
    %v1066 = vadd.f32 %v838, %v1036
    %v1067 = vadd.f32 %v841, %v1039
    %v1068 = vadd.f32 %v846, %v1044
    %v1069 = vadd.f32 %v849, %v1047
    %v1070 = vadd.f32 %v854, %v1052
    %v1071 = vadd.f32 %v857, %v1055
    %v1072 = vadd.f32 %v862, %v1060
    %v1073 = vadd.f32 %v865, %v1063
    %1074 = vmatprep.subr.bf16.mxu0 0
    %1075 = vmatpush1.bf16.msra.mxu0 %v933
    %1076 = vmatprep.subr.bf16.mxu0 0
    %1077 = vmatpush1.bf16.msra.mxu0 %v934
    %1078 = vmatprep.subr.bf16.mxu0 0
    %1079 = vmatpush1.bf16.msra.mxu0 %v935
    %1080 = vmatprep.subr.bf16.mxu0 0
    %1081 = vmatpush1.bf16.msra.mxu0 %v936
    %1082 = vmatprep.subr.bf16.mxu0 0
    %1083 = vmatpush1.bf16.msra.mxu0 0
    %1084 = vmatprep.subr.bf16.mxu0 0
    %1085 = vmatpush1.bf16.msra.mxu0 0
    %1086 = vmatprep.subr.bf16.mxu0 0
    %1087 = vmatpush1.bf16.msra.mxu0 0
    %1088 = vmatprep.subr.bf16.mxu0 0
    %1089 = vmatpush1.bf16.msra.mxu0 0
    %1090 = vmatprep.subr.bf16.mxu0 0
    %1091 = vmatpush1.bf16.msra.mxu0 0
    %1092 = vmatprep.subr.bf16.mxu0 0
    %1093 = vmatpush1.bf16.msra.mxu0 0
    %1094 = vmatprep.subr.bf16.mxu0 0
    %1095 = vmatpush1.bf16.msra.mxu0 0
    %1096 = vmatprep.subr.bf16.mxu0 0
    %1097 = vmatpush1.bf16.msra.mxu0 0
    %1098 = vmatprep.subr.bf16.mxu0 0
    %1099 = vmatpush1.bf16.msra.mxu0 0
    %1100 = vmatprep.subr.bf16.mxu0 0
    %1101 = vmatpush1.bf16.msra.mxu0 0
    %1102 = vmatprep.subr.bf16.mxu0 0
    %1103 = vmatpush1.bf16.msra.mxu0 0
    %1104 = vmatprep.subr.bf16.mxu0 0
    %1105 = vmatpush1.bf16.msra.mxu0 0
    %1106 = vmatprep.mubr.bf16.mxu0 0
    %1107 = vmatmul.mubr.bf16.gmra.mrb[0].mxu0 %v281
    %v1108 = vpop.f32.mrb[0].mxu0
    %v1109 = vadd.f32 0.0, %v1108
    %v1110 = vpop.f32.mrb[0].mxu0
    %v1111 = vpop.f32.mrb[0].mxu0
    %v1112 = vadd.f32 0.0, %v1111
    %v1113 = vpop.f32.mrb[0].mxu0
    %1114 = vmatprep.mubr.bf16.mxu0 0
    %1115 = vmatmul.mubr.bf16.gmra.mrb[0].mxu0 %v284
    %v1116 = vpop.f32.mrb[0].mxu0
    %v1117 = vadd.f32 0.0, %v1116
    %v1118 = vpop.f32.mrb[0].mxu0
    %v1119 = vpop.f32.mrb[0].mxu0
    %v1120 = vadd.f32 0.0, %v1119
    %v1121 = vpop.f32.mrb[0].mxu0
    %1122 = vmatprep.mubr.bf16.mxu0 0
    %1123 = vmatmul.mubr.bf16.gmra.mrb[0].mxu0 %v287
    %v1124 = vpop.f32.mrb[0].mxu0
    %v1125 = vadd.f32 0.0, %v1124
    %v1126 = vpop.f32.mrb[0].mxu0
    %v1127 = vpop.f32.mrb[0].mxu0
    %v1128 = vadd.f32 0.0, %v1127
    %v1129 = vpop.f32.mrb[0].mxu0
    %1130 = vmatprep.mubr.bf16.mxu0 0
    %1131 = vmatmul.mubr.bf16.gmra.mrb[0].mxu0 %v290
    %v1132 = vpop.f32.mrb[0].mxu0
    %v1133 = vadd.f32 0.0, %v1132
    %v1134 = vpop.f32.mrb[0].mxu0
    %v1135 = vpop.f32.mrb[0].mxu0
    %v1136 = vadd.f32 0.0, %v1135
    %v1137 = vpop.f32.mrb[0].mxu0
    %1138 = vdwg.mxu0
    %v1139 = vmul.f32 %v1109, 2.0
    %v1140 = vmul.f32 %v1112, 2.0
    %v1141 = vmul.f32 %v1117, 2.0
    %v1142 = vmul.f32 %v1120, 2.0
    %v1143 = vmul.f32 %v1125, 2.0
    %v1144 = vmul.f32 %v1128, 2.0
    %v1145 = vmul.f32 %v1133, 2.0
    %v1146 = vmul.f32 %v1136, 2.0
    %v1147 = vsub.f32 %v1139, %v720
    %v1148 = vsub.f32 %v1140, %v721
    %v1149 = vsub.f32 %v1141, %v722
    %v1150 = vsub.f32 %v1142, %v723
    %v1151 = vsub.f32 %v1143, %v724
    %v1152 = vsub.f32 %v1144, %v725
    %v1153 = vsub.f32 %v1145, %v726
    %v1154 = vsub.f32 %v1146, %v727
    %v1155 = vpack.c.bf16 %v1148, %v1147
    %v1156 = vpack.c.bf16 %v1150, %v1149
    %v1157 = vpack.c.bf16 %v1152, %v1151
    %v1158 = vpack.c.bf16 %v1154, %v1153
    %v1159 = vld [vmem:[#allocation10 + $0x80] sm:$0xf]
    %v1160 = vld [vmem:[#allocation10 + $0x84] sm:$0xf]
    %v1161 = vld [vmem:[#allocation10 + $0x88] sm:$0xf]
    %v1162 = vld [vmem:[#allocation10 + $0x8c] sm:$0xf]
    %v1163 = vld [vmem:[#allocation10 + $0x90] sm:$0xf]
    %v1164 = vld [vmem:[#allocation10 + $0x94] sm:$0xf]
    %v1165 = vld [vmem:[#allocation10 + $0x98] sm:$0xf]
    %v1166 = vld [vmem:[#allocation10 + $0x9c] sm:$0xf]
    %v1167 = vld [vmem:[#allocation10 + $0xa0] sm:$0xf]
    %v1168 = vld [vmem:[#allocation10 + $0xa4] sm:$0xf]
    %v1169 = vld [vmem:[#allocation10 + $0xa8] sm:$0xf]
    %v1170 = vld [vmem:[#allocation10 + $0xac] sm:$0xf]
    %v1171 = vld [vmem:[#allocation10 + $0xb0] sm:$0xf]
    %v1172 = vld [vmem:[#allocation10 + $0xb4] sm:$0xf]
    %v1173 = vld [vmem:[#allocation10 + $0xb8] sm:$0xf]
    %v1174 = vld [vmem:[#allocation10 + $0xbc] sm:$0xf]
    %v1191 = vunpack.c.l.b16 %v1159
    %v1192 = vunpack.c.l.b16 %v1160
    %v1193 = vunpack.c.l.b16 %v1161
    %v1194 = vunpack.c.l.b16 %v1162
    %v1195 = vunpack.c.l.b16 %v1163
    %v1196 = vunpack.c.l.b16 %v1164
    %v1197 = vunpack.c.l.b16 %v1165
    %v1198 = vunpack.c.l.b16 %v1166
    %v1199 = vunpack.c.l.b16 %v1167
    %v1200 = vunpack.c.l.b16 %v1168
    %v1201 = vunpack.c.l.b16 %v1169
    %v1202 = vunpack.c.l.b16 %v1170
    %v1203 = vunpack.c.l.b16 %v1171
    %v1204 = vunpack.c.l.b16 %v1172
    %v1205 = vunpack.c.l.b16 %v1173
    %v1206 = vunpack.c.l.b16 %v1174
    %v1207 = vpack.c.b16 %v1192, %v1191
    %v1208 = vpack.c.b16 %v1194, %v1193
    %v1209 = vpack.c.b16 %v1196, %v1195
    %v1210 = vpack.c.b16 %v1198, %v1197
    %v1211 = vpack.c.b16 %v1200, %v1199
    %v1212 = vpack.c.b16 %v1202, %v1201
    %v1213 = vpack.c.b16 %v1204, %v1203
    %v1214 = vpack.c.b16 %v1206, %v1205
    %1223 = vmatprep.subr.bf16.mxu0 0
    %1224 = vmatpush1.bf16.msra.mxu0 %v1207
    %1225 = vmatprep.subr.bf16.mxu0 0
    %1226 = vmatpush1.bf16.msra.mxu0 %v1208
    %1227 = vmatprep.subr.bf16.mxu0 0
    %1228 = vmatpush1.bf16.msra.mxu0 %v1209
    %1229 = vmatprep.subr.bf16.mxu0 0
    %1230 = vmatpush1.bf16.msra.mxu0 %v1210
    %1231 = vmatprep.subr.bf16.mxu0 0
    %1232 = vmatpush1.bf16.msra.mxu0 %v1211
    %1233 = vmatprep.subr.bf16.mxu0 0
    %1234 = vmatpush1.bf16.msra.mxu0 %v1212
    %1235 = vmatprep.subr.bf16.mxu0 0
    %1236 = vmatpush1.bf16.msra.mxu0 %v1213
    %1237 = vmatprep.subr.bf16.mxu0 0
    %1238 = vmatpush1.bf16.msra.mxu0 %v1214
    %1239 = vmatprep.subr.bf16.mxu0 0
    %1240 = vmatpush1.bf16.msra.mxu0 0
    %1241 = vmatprep.subr.bf16.mxu0 0
    %1242 = vmatpush1.bf16.msra.mxu0 0
    %1243 = vmatprep.subr.bf16.mxu0 0
    %1244 = vmatpush1.bf16.msra.mxu0 0
    %1245 = vmatprep.subr.bf16.mxu0 0
    %1246 = vmatpush1.bf16.msra.mxu0 0
    %1247 = vmatprep.subr.bf16.mxu0 0
    %1248 = vmatpush1.bf16.msra.mxu0 0
    %1249 = vmatprep.subr.bf16.mxu0 0
    %1250 = vmatpush1.bf16.msra.mxu0 0
    %1251 = vmatprep.subr.bf16.mxu0 0
    %1252 = vmatpush1.bf16.msra.mxu0 0
    %1253 = vmatprep.subr.bf16.mxu0 0
    %1254 = vmatpush1.bf16.msra.mxu0 0
    %1255 = vmatprep.mubr.bf16.mxu0 0
    %1256 = vmatmul.mubr.bf16.gmra.mrb[0].mxu0 %v1155
    %v1257 = vpop.f32.mrb[0].mxu0
    %v1258 = vadd.f32 0.0, %v1257
    %v1259 = vpop.f32.mrb[0].mxu0
    %v1260 = vpop.f32.mrb[0].mxu0
    %v1261 = vadd.f32 0.0, %v1260
    %v1262 = vpop.f32.mrb[0].mxu0
    %1263 = vmatprep.mubr.bf16.mxu0 0
    %1264 = vmatmul.mubr.bf16.gmra.mrb[0].mxu0 %v1156
    %v1265 = vpop.f32.mrb[0].mxu0
    %v1266 = vadd.f32 0.0, %v1265
    %v1267 = vpop.f32.mrb[0].mxu0
    %v1268 = vpop.f32.mrb[0].mxu0
    %v1269 = vadd.f32 0.0, %v1268
    %v1270 = vpop.f32.mrb[0].mxu0
    %1271 = vmatprep.mubr.bf16.mxu0 0
    %1272 = vmatmul.mubr.bf16.gmra.mrb[0].mxu0 %v1157
    %v1273 = vpop.f32.mrb[0].mxu0
    %v1274 = vadd.f32 0.0, %v1273
    %v1275 = vpop.f32.mrb[0].mxu0
    %v1276 = vpop.f32.mrb[0].mxu0
    %v1277 = vadd.f32 0.0, %v1276
    %v1278 = vpop.f32.mrb[0].mxu0
    %1279 = vmatprep.mubr.bf16.mxu0 0
    %1280 = vmatmul.mubr.bf16.gmra.mrb[0].mxu0 %v1158
    %v1281 = vpop.f32.mrb[0].mxu0
    %v1282 = vadd.f32 0.0, %v1281
    %v1283 = vpop.f32.mrb[0].mxu0
    %v1284 = vpop.f32.mrb[0].mxu0
    %v1285 = vadd.f32 0.0, %v1284
    %v1286 = vpop.f32.mrb[0].mxu0
    %1287 = vdwg.mxu0
    %v1288 = vadd.f32 %v1066, %v1258
    %v1289 = vadd.f32 %v1067, %v1261
    %v1290 = vadd.f32 %v1068, %v1266
    %v1291 = vadd.f32 %v1069, %v1269
    %v1292 = vadd.f32 %v1070, %v1274
    %v1293 = vadd.f32 %v1071, %v1277
    %v1294 = vadd.f32 %v1072, %v1282
    %v1295 = vadd.f32 %v1073, %v1285
    %1296 = vmax.xlane.f32.xlu0 %v1288
    %v1297 = vpop.xlane.xlu0 %1296
    %1298 = vmax.xlane.f32.xlu0 %v1289
    %v1299 = vpop.xlane.xlu0 %1298
    %1300 = vmax.xlane.f32.xlu0 %v1290
    %v1301 = vpop.xlane.xlu0 %1300
    %1302 = vmax.xlane.f32.xlu0 %v1291
    %v1303 = vpop.xlane.xlu0 %1302
    %1304 = vmax.xlane.f32.xlu0 %v1292
    %v1305 = vpop.xlane.xlu0 %1304
    %1306 = vmax.xlane.f32.xlu0 %v1293
    %v1307 = vpop.xlane.xlu0 %1306
    %1308 = vmax.xlane.f32.xlu0 %v1294
    %v1309 = vpop.xlane.xlu0 %1308
    %1310 = vmax.xlane.f32.xlu0 %v1295
    %v1311 = vpop.xlane.xlu0 %1310
    %v1312 = vsub.f32 %v1288, %v1297
    %v1313 = vsub.f32 %v1289, %v1299
    %v1314 = vsub.f32 %v1290, %v1301
    %v1315 = vsub.f32 %v1291, %v1303
    %v1316 = vsub.f32 %v1292, %v1305
    %v1317 = vsub.f32 %v1293, %v1307
    %v1318 = vsub.f32 %v1294, %v1309
    %v1319 = vsub.f32 %v1295, %v1311
    %v1320 = vmul.f32 %v1312, 1.442695
    %v1321 = vpow.pop %v1320
    %v1322 = vmul.f32 %v1313, 1.442695
    %v1323 = vpow.pop %v1322
    %v1324 = vmul.f32 %v1314, 1.442695
    %v1325 = vpow.pop %v1324
    %v1326 = vmul.f32 %v1315, 1.442695
    %v1327 = vpow.pop %v1326
    %v1328 = vmul.f32 %v1316, 1.442695
    %v1329 = vpow.pop %v1328
    %v1330 = vmul.f32 %v1317, 1.442695
    %v1331 = vpow.pop %v1330
    %v1332 = vmul.f32 %v1318, 1.442695
    %v1333 = vpow.pop %v1332
    %v1334 = vmul.f32 %v1319, 1.442695
    %v1335 = vpow.pop %v1334
    %1336 = vadd.xlane.f32.xlu0 %v1321
    %v1337 = vpop.xlane.xlu0 %1336
    %1338 = vadd.xlane.f32.xlu0 %v1323
    %v1339 = vpop.xlane.xlu0 %1338
    %1340 = vadd.xlane.f32.xlu0 %v1325
    %v1341 = vpop.xlane.xlu0 %1340
    %1342 = vadd.xlane.f32.xlu0 %v1327
    %v1343 = vpop.xlane.xlu0 %1342
    %1344 = vadd.xlane.f32.xlu0 %v1329
    %v1345 = vpop.xlane.xlu0 %1344
    %1346 = vadd.xlane.f32.xlu0 %v1331
    %v1347 = vpop.xlane.xlu0 %1346
    %1348 = vadd.xlane.f32.xlu0 %v1333
    %v1349 = vpop.xlane.xlu0 %1348
    %1350 = vadd.xlane.f32.xlu0 %v1335
    %v1351 = vpop.xlane.xlu0 %1350
    %v1352 = vlog2.pop %v1337
    %v1353 = vmul.f32 %v1352, 0.6931472
    %v1354 = vlog2.pop %v1339
    %v1355 = vmul.f32 %v1354, 0.6931472
    %v1356 = vlog2.pop %v1341
    %v1357 = vmul.f32 %v1356, 0.6931472
    %v1358 = vlog2.pop %v1343
    %v1359 = vmul.f32 %v1358, 0.6931472
    %v1360 = vlog2.pop %v1345
    %v1361 = vmul.f32 %v1360, 0.6931472
    %v1362 = vlog2.pop %v1347
    %v1363 = vmul.f32 %v1362, 0.6931472
    %v1364 = vlog2.pop %v1349
    %v1365 = vmul.f32 %v1364, 0.6931472
    %v1366 = vlog2.pop %v1351
    %v1367 = vmul.f32 %v1366, 0.6931472
    %v1368 = vsub.f32 %v1312, %v1353
    %v1369 = vsub.f32 %v1313, %v1355
    %v1370 = vsub.f32 %v1314, %v1357
    %v1371 = vsub.f32 %v1315, %v1359
    %v1372 = vsub.f32 %v1316, %v1361
    %v1373 = vsub.f32 %v1317, %v1363
    %v1374 = vsub.f32 %v1318, %v1365
    %v1375 = vsub.f32 %v1319, %v1367
    %1376 = vst [vmem:[#allocation13] sm:$0xff] %v1368
    %1377 = vst [vmem:[#allocation13 + $0x8] sm:$0xff] %v1369
    %1378 = vst [vmem:[#allocation13 + $0x10] sm:$0xff] %v1370
    %1379 = vst [vmem:[#allocation13 + $0x18] sm:$0xff] %v1371
    %1380 = vst [vmem:[#allocation13 + $0x20] sm:$0xff] %v1372
    %1381 = vst [vmem:[#allocation13 + $0x28] sm:$0xff] %v1373
    %1382 = vst [vmem:[#allocation13 + $0x30] sm:$0xff] %v1374
    %1383 = vst [vmem:[#allocation13 + $0x38] sm:$0xff] %v1375
    // Predicated region
    $region50: #{cheb_net_forward.1} parent=1 // pred_check
      _
    $region51: #{cheb_net_forward.1} parent=1 // pred_check_branch
      %1385 = sbr.rel (0) target = $region53
    $region52: #{cheb_net_forward.1} parent=1 // pred_region
      %s1387 = ssub.s32 1024, 1024
      %1388 = vsyncadd [#allocation4], %s1387
      %s1389 = sshll.u32 [#allocation13], 4
      %s1390 = int_to_ptr.vmem [resolvable:$true] %s1389
      %1395 = dma.vmem_to_hbm [thread:$0]  %s1390, 1024, %s6, [#allocation4], 128, 128, 8
    $region53: #{cheb_net_forward.1} parent=1 // pred_fallthru
      _
    // Predicated region
    $region54: #{cheb_net_forward.1} parent=1 // pred_check
      _
    $region55: #{cheb_net_forward.1} parent=1 // pred_check_branch
      %1397 = sbr.rel (0) target = $region57
    $region56: #{cheb_net_forward.1} parent=1 // pred_region
      %1398 = dma.done [#allocation4], 1024
    $region57: #{cheb_net_forward.1} parent=1 // pred_fallthru
      _
    %1399 = vsyncpa [#allocation3], 1
    %1400 = vsyncpa [#allocation6], 1
    %1401 = vsyncpa [#allocation9], 1
    %1402 = vsyncpa [#allocation12], 1
    %1403 = vsyncpa [#allocation4], 1

</llo_original>
